<compile_context>
chip_gen: v7x
topology: tpu7x:2x2x1
jax: 0.10.0
libtpu: 0.0.40
codegen_flags: <defaults>
</compile_context>

<pallas_src>
import jax
import jax.numpy as jnp
from jax.experimental import pallas as pl
from jax.experimental.pallas import tpu as pltpu

EPS = 1e-5


def _bn_kernel(x_ref, gamma_ref, beta_ref, o_ref):
    # x_ref: (C, HW) f32; gamma_ref/beta_ref: (C, 1) f32; o_ref: (C, HW) f32
    x = x_ref[...]
    hw = x.shape[1]
    inv_hw = 1.0 / hw

    # MXU reduce-broadcast: (C, HW) @ (HW, HW) all-ones gives the per-channel
    # sum replicated across every lane — no XLU lane-reduce / lane-broadcast.
    ones = jnp.ones((hw, hw), dtype=jnp.float32)
    sum_b = jnp.dot(x, ones, preferred_element_type=jnp.float32)
    sumsq_b = jnp.dot(x * x, ones, preferred_element_type=jnp.float32)

    mean_b = sum_b * inv_hw
    # One-pass biased variance (PyTorch normalizes with the biased batch
    # variance); clamp against tiny negative values from cancellation.
    var_b = jnp.maximum(sumsq_b * inv_hw - mean_b * mean_b, 0.0)
    inv_std = jax.lax.rsqrt(var_b + EPS)

    centered = x - mean_b                      # x is dead after this point
    scale = inv_std * gamma_ref[...]           # (C,1) broadcasts over lanes
    o_ref[...] = centered * scale + beta_ref[...]


def batchnorm2d_pallas(x_nchw, gamma, beta):
    """x_nchw: (1, C, H, W) float32; gamma, beta: (C,) float32."""
    n, c, h, w = x_nchw.shape
    # Zero-copy (C, HW) view relies on N == 1, which matches the module input.
    # TODO(synk): add an N>1 path (reduce over batch+spatial) if ever needed.
    assert n == 1, "kernel specialised for batch size 1 (as in the module)"

    x2d = x_nchw.reshape(c, h * w)      # free reshape, no transpose
    g2d = gamma.reshape(c, 1)
    b2d = beta.reshape(c, 1)

    out2d = pl.pallas_call(
        _bn_kernel,
        out_shape=jax.ShapeDtypeStruct((c, h * w), x2d.dtype),
        in_specs=[
            pl.BlockSpec(memory_space=pltpu.MemorySpace.VMEM),
            pl.BlockSpec(memory_space=pltpu.MemorySpace.VMEM),
            pl.BlockSpec(memory_space=pltpu.MemorySpace.VMEM),
        ],
        out_specs=pl.BlockSpec(memory_space=pltpu.MemorySpace.VMEM),
    )(x2d, g2d, b2d)

    return out2d.reshape(n, c, h, w)    # free reshape back to NCHW


def batchnorm2d_ref(x_nchw, gamma, beta):
    mean = jnp.mean(x_nchw, axis=(0, 2, 3), keepdims=True)
    var = jnp.mean((x_nchw - mean) ** 2, axis=(0, 2, 3), keepdims=True)
    g = gamma.reshape(1, -1, 1, 1)
    b = beta.reshape(1, -1, 1, 1)
    return (x_nchw - mean) * jax.lax.rsqrt(var + EPS) * g + b


if __name__ == "__main__":
    key = jax.random.PRNGKey(0)
    kx, kg, kb = jax.random.split(key, 3)

    N, C, H, W = 1, 208, 7, 7
    x = jax.random.normal(kx, (N, C, H, W), dtype=jnp.float32)
    # deterministic, non-trivial affine params (PyTorch default would be 1/0)
    gamma = 1.0 + 0.1 * jax.random.normal(kg, (C,), dtype=jnp.float32)
    beta = 0.1 * jax.random.normal(kb, (C,), dtype=jnp.float32)

    out = batchnorm2d_pallas(x, gamma, beta)
    out = jax.block_until_ready(out)

    ref = batchnorm2d_ref(x, gamma, beta)
    assert out.shape == (N, C, H, W)
    assert jnp.allclose(out, ref, atol=1e-4, rtol=1e-4)

    print("KERNEL_OK")
</pallas_src>

<mosaic_0001>
module attributes {stable_mosaic.version = 11 : i64} {
  func.func @_bn_kernel(%arg0: memref<208x49xf32, #tpu.memory_space<vmem>>, %arg1: memref<208x1xf32, #tpu.memory_space<vmem>>, %arg2: memref<208x1xf32, #tpu.memory_space<vmem>>, %arg3: memref<208x49xf32, #tpu.memory_space<vmem>>) attributes {dimension_semantics = [], scalar_prefetch = 0 : i64, scratch_operands = 0 : i64, tpu.core_type = #tpu.core_type<tc>} {
    %c0 = arith.constant 0 : index
    %c0_0 = arith.constant 0 : index
    %0 = vector.load %arg0[%c0, %c0_0] : memref<208x49xf32, #tpu.memory_space<vmem>>, vector<208x49xf32>
    %cst = arith.constant 1.000000e+00 : f32
    %1 = vector.broadcast %cst : f32 to vector<49x49xf32>
    %cst_1 = arith.constant dense<0.000000e+00> : vector<208x49xf32>
    %2 = tpu.matmul %0, %1, %cst_1 {dimension_numbers = #tpu.dot_dimension_numbers<[1], [0], [0], [1], [0, 0, 1, 1], [], []>} : vector<208x49xf32>, vector<49x49xf32>, vector<208x49xf32> -> vector<208x49xf32>
    %3 = arith.mulf %0, %0 : vector<208x49xf32>
    %cst_2 = arith.constant dense<0.000000e+00> : vector<208x49xf32>
    %4 = tpu.matmul %3, %1, %cst_2 {dimension_numbers = #tpu.dot_dimension_numbers<[1], [0], [0], [1], [0, 0, 1, 1], [], []>} : vector<208x49xf32>, vector<49x49xf32>, vector<208x49xf32> -> vector<208x49xf32>
    %cst_3 = arith.constant 0.0204081628 : f32
    %5 = vector.broadcast %cst_3 : f32 to vector<208x49xf32>
    %6 = arith.mulf %2, %5 : vector<208x49xf32>
    %cst_4 = arith.constant 0.0204081628 : f32
    %7 = vector.broadcast %cst_4 : f32 to vector<208x49xf32>
    %8 = arith.mulf %4, %7 : vector<208x49xf32>
    %9 = arith.mulf %6, %6 : vector<208x49xf32>
    %10 = arith.subf %8, %9 : vector<208x49xf32>
    %cst_5 = arith.constant 0.000000e+00 : f32
    %11 = vector.broadcast %cst_5 : f32 to vector<208x49xf32>
    %12 = arith.maximumf %10, %11 : vector<208x49xf32>
    %cst_6 = arith.constant 9.99999974E-6 : f32
    %13 = vector.broadcast %cst_6 : f32 to vector<208x49xf32>
    %14 = arith.addf %12, %13 : vector<208x49xf32>
    %15 = math.rsqrt %14 : vector<208x49xf32>
    %16 = arith.subf %0, %6 : vector<208x49xf32>
    %c0_7 = arith.constant 0 : index
    %c0_8 = arith.constant 0 : index
    %17 = vector.load %arg1[%c0_7, %c0_8] : memref<208x1xf32, #tpu.memory_space<vmem>>, vector<208x1xf32>
    %18 = vector.broadcast %17 : vector<208x1xf32> to vector<208x49xf32>
    %19 = arith.mulf %15, %18 : vector<208x49xf32>
    %20 = arith.mulf %16, %19 : vector<208x49xf32>
    %c0_9 = arith.constant 0 : index
    %c0_10 = arith.constant 0 : index
    %21 = vector.load %arg2[%c0_9, %c0_10] : memref<208x1xf32, #tpu.memory_space<vmem>>, vector<208x1xf32>
    %22 = vector.broadcast %21 : vector<208x1xf32> to vector<208x49xf32>
    %23 = arith.addf %20, %22 : vector<208x49xf32>
    %c0_11 = arith.constant 0 : index
    %c0_12 = arith.constant 0 : index
    %24 = vector.load %arg3[%c0_11, %c0_12] : memref<208x49xf32, #tpu.memory_space<vmem>>, vector<208x49xf32>
    tpu.vector_store %arg3[%c0_11, %c0_12], %23 {strides = array<i32>} : memref<208x49xf32, #tpu.memory_space<vmem>>, vector<208x49xf32>,
    return
  }
}

</mosaic_0001>

<llo_original>
// kernel: tpu_custom_call.1
$region0: #{tpu_custom_call.1}
  #allocation0 [shape = 'u32[]', space=smem, size = 0x4, offset = 0x4, fixed_abs, tag = 'smem constant byte address 0x4 - core index']
  #allocation1 [shape = 'u32[144,128]{1,0:T(1,128)}', space=vmem, size = 0x12000, scoped, tag = 'internal scratch']
  %s0 = inlined_call_operand.vmem [shape: f32[208,49], index: 0, kind: input, shape index: {}]
  %s1 = inlined_call_operand.vmem [shape: f32[208,1], index: 1, kind: input, shape index: {}]
  %s2 = inlined_call_operand.vmem [shape: f32[208,1], index: 2, kind: input, shape index: {}]
  %s3 = inlined_call_operand.vmem [shape: f32[208,49], index: 3, kind: output, shape index: {}]
  %s4 = sld [smem:[#allocation0]]
  $region22: #{tpu_custom_call.1} parent=0
    _
  %s6 = ssub.s32 1, %s4
  %s7 = scalar_select 0, %s6, %s4
  // Predicated region
  $region2: #{tpu_custom_call.1} parent=0 // pred_check
    _
  $region3: #{tpu_custom_call.1} parent=0 // pred_check_branch
    %9 = sbr.rel (0) target = $region5
  $region4: #{tpu_custom_call.1} parent=0 // pred_region
    _
  $region5: #{tpu_custom_call.1} parent=0 // pred_fallthru
    _
  // Predicated region
  $region6: #{tpu_custom_call.1} parent=0 // pred_check
    _
  $region7: #{tpu_custom_call.1} parent=0 // pred_check_branch
    %11 = sbr.rel (0) target = $region9
  $region8: #{tpu_custom_call.1} parent=0 // pred_region
    _
  $region9: #{tpu_custom_call.1} parent=0 // pred_fallthru
    _
  // Predicated region
  $region10: #{tpu_custom_call.1} parent=0 // pred_check
    _
  $region11: #{tpu_custom_call.1} parent=0 // pred_check_branch
    %13 = sbr.rel (0) target = $region13
  $region12: #{tpu_custom_call.1} parent=0 // pred_region
    _
  $region13: #{tpu_custom_call.1} parent=0 // pred_fallthru
    _
  %v14 = vld [vmem:[%s0] sm:$0xff]
  %v15 = vld [vmem:[%s0 + $0x8] sm:$0xff]
  %v16 = vld [vmem:[%s0 + $0x10] sm:$0xff]
  %v17 = vld [vmem:[%s0 + $0x18] sm:$0xff]
  %v18 = vld [vmem:[%s0 + $0x20] sm:$0xff]
  %v19 = vld [vmem:[%s0 + $0x28] sm:$0xff]
  %v20 = vld [vmem:[%s0 + $0x30] sm:$0xff]
  %v21 = vld [vmem:[%s0 + $0x38] sm:$0xff]
  %v22 = vld [vmem:[%s0 + $0x40] sm:$0xff]
  %v23 = vld [vmem:[%s0 + $0x48] sm:$0xff]
  %v24 = vld [vmem:[%s0 + $0x50] sm:$0xff]
  %v25 = vld [vmem:[%s0 + $0x58] sm:$0xff]
  %v26 = vld [vmem:[%s0 + $0x60] sm:$0xff]
  %v27 = vld [vmem:[%s0 + $0x68] sm:$0xff]
  %v28 = vld [vmem:[%s0 + $0x70] sm:$0xff]
  %v29 = vld [vmem:[%s0 + $0x78] sm:$0xff]
  %v30 = vld [vmem:[%s0 + $0x80] sm:$0xff]
  %v31 = vld [vmem:[%s0 + $0x88] sm:$0xff]
  %v32 = vld [vmem:[%s0 + $0x90] sm:$0xff]
  %v33 = vld [vmem:[%s0 + $0x98] sm:$0xff]
  %v34 = vld [vmem:[%s0 + $0xa0] sm:$0xff]
  %v35 = vld [vmem:[%s0 + $0xa8] sm:$0xff]
  %v36 = vld [vmem:[%s0 + $0xb0] sm:$0xff]
  %v37 = vld [vmem:[%s0 + $0xb8] sm:$0xff]
  %v38 = vld [vmem:[%s0 + $0xc0] sm:$0xff]
  %v39 = vld [vmem:[%s0 + $0xc8] sm:$0xff]
  %vm40 = vcmask 400384
  %v42 = vsel %vm40, %v14, 0
  %v45 = vsel %vm40, %v15, 0
  %v48 = vsel %vm40, %v16, 0
  %v51 = vsel %vm40, %v17, 0
  %v54 = vsel %vm40, %v18, 0
  %v57 = vsel %vm40, %v19, 0
  %v60 = vsel %vm40, %v20, 0
  %v63 = vsel %vm40, %v21, 0
  %v66 = vsel %vm40, %v22, 0
  %v69 = vsel %vm40, %v23, 0
  %v72 = vsel %vm40, %v24, 0
  %v75 = vsel %vm40, %v25, 0
  %v78 = vsel %vm40, %v26, 0
  %v81 = vsel %vm40, %v27, 0
  %v84 = vsel %vm40, %v28, 0
  %v87 = vsel %vm40, %v29, 0
  %v90 = vsel %vm40, %v30, 0
  %v93 = vsel %vm40, %v31, 0
  %v96 = vsel %vm40, %v32, 0
  %v99 = vsel %vm40, %v33, 0
  %v102 = vsel %vm40, %v34, 0
  %v105 = vsel %vm40, %v35, 0
  %v108 = vsel %vm40, %v36, 0
  %v111 = vsel %vm40, %v37, 0
  %v114 = vsel %vm40, %v38, 0
  %v117 = vsel %vm40, %v39, 0
  %vm119 = vcmask 1040384
  %v121 = vsel %vm119, 1.0, 0
  %123 = vmatprep.subr.mxu0 0.0
  %124 = vmatpush1.msra.mxu0 1.0
  %125 = vmatprep.subr.mxu0 0.0
  %126 = vmatpush1.msra.mxu0 1.0
  %127 = vmatprep.subr.mxu0 0.0
  %128 = vmatpush1.msra.mxu0 1.0
  %129 = vmatprep.subr.mxu0 0.0
  %130 = vmatpush1.msra.mxu0 1.0
  %131 = vmatprep.subr.mxu0 0.0
  %132 = vmatpush1.msra.mxu0 1.0
  %133 = vmatprep.subr.mxu0 0.0
  %134 = vmatpush1.msra.mxu0 1.0
  %135 = vmatprep.subr.mxu0 0.0
  %136 = vmatpush1.msra.mxu0 %v121
  %137 = vmatprep.subr.mxu0 0.0
  %138 = vmatpush1.msra.mxu0 0.0
  %139 = vmatprep.subr.mxu0 0.0
  %140 = vmatpush1.msra.mxu0 0.0
  %141 = vmatprep.subr.mxu0 0.0
  %142 = vmatpush1.msra.mxu0 0.0
  %143 = vmatprep.subr.mxu0 0.0
  %144 = vmatpush1.msra.mxu0 0.0
  %145 = vmatprep.subr.mxu0 0.0
  %146 = vmatpush1.msra.mxu0 0.0
  %147 = vmatprep.subr.mxu0 0.0
  %148 = vmatpush1.msra.mxu0 0.0
  %149 = vmatprep.subr.mxu0 0.0
  %150 = vmatpush1.msra.mxu0 0.0
  %151 = vmatprep.subr.mxu0 0.0
  %152 = vmatpush1.msra.mxu0 0.0
  %153 = vmatprep.subr.mxu0 0.0
  %154 = vmatpush1.msra.mxu0 0.0
  %155 = vmatprep.subr.mxu0 0.0
  %156 = vmatpush1.msra.mxu0 0.0
  %157 = vmatprep.subr.mxu0 0.0
  %158 = vmatpush1.msra.mxu0 0.0
  %159 = vmatprep.subr.mxu0 0.0
  %160 = vmatpush1.msra.mxu0 0.0
  %161 = vmatprep.subr.mxu0 0.0
  %162 = vmatpush1.msra.mxu0 0.0
  %163 = vmatprep.subr.mxu0 0.0
  %164 = vmatpush1.msra.mxu0 0.0
  %165 = vmatprep.subr.mxu0 0.0
  %166 = vmatpush1.msra.mxu0 0.0
  %167 = vmatprep.subr.mxu0 0.0
  %168 = vmatpush1.msra.mxu0 0.0
  %169 = vmatprep.subr.mxu0 0.0
  %170 = vmatpush1.msra.mxu0 0.0
  %171 = vmatprep.subr.mxu0 0.0
  %172 = vmatpush1.msra.mxu0 0.0
  %173 = vmatprep.subr.mxu0 0.0
  %174 = vmatpush1.msra.mxu0 0.0
  %175 = vmatprep.subr.mxu0 0.0
  %176 = vmatpush1.msra.mxu0 0.0
  %177 = vmatprep.subr.mxu0 0.0
  %178 = vmatpush1.msra.mxu0 0.0
  %179 = vmatprep.subr.mxu0 0.0
  %180 = vmatpush1.msra.mxu0 0.0
  %181 = vmatprep.subr.mxu0 0.0
  %182 = vmatpush1.msra.mxu0 0.0
  %183 = vmatprep.subr.mxu0 0.0
  %184 = vmatpush1.msra.mxu0 0.0
  %185 = vmatprep.subr.mxu0 0.0
  %186 = vmatpush1.msra.mxu0 0.0
  %187 = vmatprep.mubr.f32.mxu0 0.0
  %188 = vmatmul.mubr.f32.gmra.mrb[0].mxu0 %v42
  %v189 = vpop.f32.mrb[0].mxu0
  %v190 = vadd.f32 0.0, %v189
  %v191 = vpop.f32.mrb[0].mxu0
  %192 = vmatprep.mubr.f32.mxu0 0.0
  %193 = vmatmul.mubr.f32.gmra.mrb[0].mxu0 %v45
  %v194 = vpop.f32.mrb[0].mxu0
  %v195 = vadd.f32 0.0, %v194
  %v196 = vpop.f32.mrb[0].mxu0
  %197 = vmatprep.mubr.f32.mxu0 0.0
  %198 = vmatmul.mubr.f32.gmra.mrb[0].mxu0 %v48
  %v199 = vpop.f32.mrb[0].mxu0
  %v200 = vadd.f32 0.0, %v199
  %v201 = vpop.f32.mrb[0].mxu0
  %202 = vmatprep.mubr.f32.mxu0 0.0
  %203 = vmatmul.mubr.f32.gmra.mrb[0].mxu0 %v51
  %v204 = vpop.f32.mrb[0].mxu0
  %v205 = vadd.f32 0.0, %v204
  %v206 = vpop.f32.mrb[0].mxu0
  %207 = vmatprep.mubr.f32.mxu0 0.0
  %208 = vmatmul.mubr.f32.gmra.mrb[0].mxu0 %v54
  %v209 = vpop.f32.mrb[0].mxu0
  %v210 = vadd.f32 0.0, %v209
  %v211 = vpop.f32.mrb[0].mxu0
  %212 = vmatprep.mubr.f32.mxu0 0.0
  %213 = vmatmul.mubr.f32.gmra.mrb[0].mxu0 %v57
  %v214 = vpop.f32.mrb[0].mxu0
  %v215 = vadd.f32 0.0, %v214
  %v216 = vpop.f32.mrb[0].mxu0
  %217 = vmatprep.mubr.f32.mxu0 0.0
  %218 = vmatmul.mubr.f32.gmra.mrb[0].mxu0 %v60
  %v219 = vpop.f32.mrb[0].mxu0
  %v220 = vadd.f32 0.0, %v219
  %v221 = vpop.f32.mrb[0].mxu0
  %222 = vmatprep.mubr.f32.mxu0 0.0
  %223 = vmatmul.mubr.f32.gmra.mrb[0].mxu0 %v63
  %v224 = vpop.f32.mrb[0].mxu0
  %v225 = vadd.f32 0.0, %v224
  %v226 = vpop.f32.mrb[0].mxu0
  %227 = vmatprep.mubr.f32.mxu0 0.0
  %228 = vmatmul.mubr.f32.gmra.mrb[0].mxu0 %v66
  %v229 = vpop.f32.mrb[0].mxu0
  %v230 = vadd.f32 0.0, %v229
  %v231 = vpop.f32.mrb[0].mxu0
  %232 = vmatprep.mubr.f32.mxu0 0.0
  %233 = vmatmul.mubr.f32.gmra.mrb[0].mxu0 %v69
  %v234 = vpop.f32.mrb[0].mxu0
  %v235 = vadd.f32 0.0, %v234
  %v236 = vpop.f32.mrb[0].mxu0
  %237 = vmatprep.mubr.f32.mxu0 0.0
  %238 = vmatmul.mubr.f32.gmra.mrb[0].mxu0 %v72
  %v239 = vpop.f32.mrb[0].mxu0
  %v240 = vadd.f32 0.0, %v239
  %v241 = vpop.f32.mrb[0].mxu0
  %242 = vmatprep.mubr.f32.mxu0 0.0
  %243 = vmatmul.mubr.f32.gmra.mrb[0].mxu0 %v75
  %v244 = vpop.f32.mrb[0].mxu0
  %v245 = vadd.f32 0.0, %v244
  %v246 = vpop.f32.mrb[0].mxu0
  %247 = vmatprep.mubr.f32.mxu0 0.0
  %248 = vmatmul.mubr.f32.gmra.mrb[0].mxu0 %v78
  %v249 = vpop.f32.mrb[0].mxu0
  %v250 = vadd.f32 0.0, %v249
  %v251 = vpop.f32.mrb[0].mxu0
  %252 = vmatprep.mubr.f32.mxu0 0.0
  %253 = vmatmul.mubr.f32.gmra.mrb[0].mxu0 %v81
  %v254 = vpop.f32.mrb[0].mxu0
  %v255 = vadd.f32 0.0, %v254
  %v256 = vpop.f32.mrb[0].mxu0
  %257 = vmatprep.mubr.f32.mxu0 0.0
  %258 = vmatmul.mubr.f32.gmra.mrb[0].mxu0 %v84
  %v259 = vpop.f32.mrb[0].mxu0
  %v260 = vadd.f32 0.0, %v259
  %v261 = vpop.f32.mrb[0].mxu0
  %262 = vmatprep.mubr.f32.mxu0 0.0
  %263 = vmatmul.mubr.f32.gmra.mrb[0].mxu0 %v87
  %v264 = vpop.f32.mrb[0].mxu0
  %v265 = vadd.f32 0.0, %v264
  %v266 = vpop.f32.mrb[0].mxu0
  %267 = vmatprep.mubr.f32.mxu0 0.0
  %268 = vmatmul.mubr.f32.gmra.mrb[0].mxu0 %v90
  %v269 = vpop.f32.mrb[0].mxu0
  %v270 = vadd.f32 0.0, %v269
  %v271 = vpop.f32.mrb[0].mxu0
  %272 = vmatprep.mubr.f32.mxu0 0.0
  %273 = vmatmul.mubr.f32.gmra.mrb[0].mxu0 %v93
  %v274 = vpop.f32.mrb[0].mxu0
  %v275 = vadd.f32 0.0, %v274
  %v276 = vpop.f32.mrb[0].mxu0
  %277 = vmatprep.mubr.f32.mxu0 0.0
  %278 = vmatmul.mubr.f32.gmra.mrb[0].mxu0 %v96
  %v279 = vpop.f32.mrb[0].mxu0
  %v280 = vadd.f32 0.0, %v279
  %v281 = vpop.f32.mrb[0].mxu0
  %282 = vmatprep.mubr.f32.mxu0 0.0
  %283 = vmatmul.mubr.f32.gmra.mrb[0].mxu0 %v99
  %v284 = vpop.f32.mrb[0].mxu0
  %v285 = vadd.f32 0.0, %v284
  %v286 = vpop.f32.mrb[0].mxu0
  %287 = vmatprep.mubr.f32.mxu0 0.0
  %288 = vmatmul.mubr.f32.gmra.mrb[0].mxu0 %v102
  %v289 = vpop.f32.mrb[0].mxu0
  %v290 = vadd.f32 0.0, %v289
  %v291 = vpop.f32.mrb[0].mxu0
  %292 = vmatprep.mubr.f32.mxu0 0.0
  %293 = vmatmul.mubr.f32.gmra.mrb[0].mxu0 %v105
  %v294 = vpop.f32.mrb[0].mxu0
  %v295 = vadd.f32 0.0, %v294
  %v296 = vpop.f32.mrb[0].mxu0
  %297 = vmatprep.mubr.f32.mxu0 0.0
  %298 = vmatmul.mubr.f32.gmra.mrb[0].mxu0 %v108
  %v299 = vpop.f32.mrb[0].mxu0
  %v300 = vadd.f32 0.0, %v299
  %v301 = vpop.f32.mrb[0].mxu0
  %302 = vmatprep.mubr.f32.mxu0 0.0
  %303 = vmatmul.mubr.f32.gmra.mrb[0].mxu0 %v111
  %v304 = vpop.f32.mrb[0].mxu0
  %v305 = vadd.f32 0.0, %v304
  %v306 = vpop.f32.mrb[0].mxu0
  %307 = vmatprep.mubr.f32.mxu0 0.0
  %308 = vmatmul.mubr.f32.gmra.mrb[0].mxu0 %v114
  %v309 = vpop.f32.mrb[0].mxu0
  %v310 = vadd.f32 0.0, %v309
  %v311 = vpop.f32.mrb[0].mxu0
  %312 = vmatprep.mubr.f32.mxu0 0.0
  %313 = vmatmul.mubr.f32.gmra.mrb[0].mxu0 %v117
  %v314 = vpop.f32.mrb[0].mxu0
  %v315 = vadd.f32 0.0, %v314
  %v316 = vpop.f32.mrb[0].mxu0
  %317 = vdwg.mxu0
  %v318 = vmul.f32 %v14, %v14
  %v319 = vmul.f32 %v15, %v15
  %v320 = vmul.f32 %v16, %v16
  %v321 = vmul.f32 %v17, %v17
  %v322 = vmul.f32 %v18, %v18
  %v323 = vmul.f32 %v19, %v19
  %v324 = vmul.f32 %v20, %v20
  %v325 = vmul.f32 %v21, %v21
  %v326 = vmul.f32 %v22, %v22
  %v327 = vmul.f32 %v23, %v23
  %v328 = vmul.f32 %v24, %v24
  %v329 = vmul.f32 %v25, %v25
  %v330 = vmul.f32 %v26, %v26
  %v331 = vmul.f32 %v27, %v27
  %v332 = vmul.f32 %v28, %v28
  %v333 = vmul.f32 %v29, %v29
  %v334 = vmul.f32 %v30, %v30
  %v335 = vmul.f32 %v31, %v31
  %v336 = vmul.f32 %v32, %v32
  %v337 = vmul.f32 %v33, %v33
  %v338 = vmul.f32 %v34, %v34
  %v339 = vmul.f32 %v35, %v35
  %v340 = vmul.f32 %v36, %v36
  %v341 = vmul.f32 %v37, %v37
  %v342 = vmul.f32 %v38, %v38
  %v343 = vmul.f32 %v39, %v39
  %v345 = vsel %vm40, %v318, 0
  %v348 = vsel %vm40, %v319, 0
  %v351 = vsel %vm40, %v320, 0
  %v354 = vsel %vm40, %v321, 0
  %v357 = vsel %vm40, %v322, 0
  %v360 = vsel %vm40, %v323, 0
  %v363 = vsel %vm40, %v324, 0
  %v366 = vsel %vm40, %v325, 0
  %v369 = vsel %vm40, %v326, 0
  %v372 = vsel %vm40, %v327, 0
  %v375 = vsel %vm40, %v328, 0
  %v378 = vsel %vm40, %v329, 0
  %v381 = vsel %vm40, %v330, 0
  %v384 = vsel %vm40, %v331, 0
  %v387 = vsel %vm40, %v332, 0
  %v390 = vsel %vm40, %v333, 0
  %v393 = vsel %vm40, %v334, 0
  %v396 = vsel %vm40, %v335, 0
  %v399 = vsel %vm40, %v336, 0
  %v402 = vsel %vm40, %v337, 0
  %v405 = vsel %vm40, %v338, 0
  %v408 = vsel %vm40, %v339, 0
  %v411 = vsel %vm40, %v340, 0
  %v414 = vsel %vm40, %v341, 0
  %v417 = vsel %vm40, %v342, 0
  %v420 = vsel %vm40, %v343, 0
  %422 = vmatprep.subr.mxu0 0.0
  %423 = vmatpush1.msra.mxu0 1.0
  %424 = vmatprep.subr.mxu0 0.0
  %425 = vmatpush1.msra.mxu0 1.0
  %426 = vmatprep.subr.mxu0 0.0
  %427 = vmatpush1.msra.mxu0 1.0
  %428 = vmatprep.subr.mxu0 0.0
  %429 = vmatpush1.msra.mxu0 1.0
  %430 = vmatprep.subr.mxu0 0.0
  %431 = vmatpush1.msra.mxu0 1.0
  %432 = vmatprep.subr.mxu0 0.0
  %433 = vmatpush1.msra.mxu0 1.0
  %434 = vmatprep.subr.mxu0 0.0
  %435 = vmatpush1.msra.mxu0 %v121
  %436 = vmatprep.subr.mxu0 0.0
  %437 = vmatpush1.msra.mxu0 0.0
  %438 = vmatprep.subr.mxu0 0.0
  %439 = vmatpush1.msra.mxu0 0.0
  %440 = vmatprep.subr.mxu0 0.0
  %441 = vmatpush1.msra.mxu0 0.0
  %442 = vmatprep.subr.mxu0 0.0
  %443 = vmatpush1.msra.mxu0 0.0
  %444 = vmatprep.subr.mxu0 0.0
  %445 = vmatpush1.msra.mxu0 0.0
  %446 = vmatprep.subr.mxu0 0.0
  %447 = vmatpush1.msra.mxu0 0.0
  %448 = vmatprep.subr.mxu0 0.0
  %449 = vmatpush1.msra.mxu0 0.0
  %450 = vmatprep.subr.mxu0 0.0
  %451 = vmatpush1.msra.mxu0 0.0
  %452 = vmatprep.subr.mxu0 0.0
  %453 = vmatpush1.msra.mxu0 0.0
  %454 = vmatprep.subr.mxu0 0.0
  %455 = vmatpush1.msra.mxu0 0.0
  %456 = vmatprep.subr.mxu0 0.0
  %457 = vmatpush1.msra.mxu0 0.0
  %458 = vmatprep.subr.mxu0 0.0
  %459 = vmatpush1.msra.mxu0 0.0
  %460 = vmatprep.subr.mxu0 0.0
  %461 = vmatpush1.msra.mxu0 0.0
  %462 = vmatprep.subr.mxu0 0.0
  %463 = vmatpush1.msra.mxu0 0.0
  %464 = vmatprep.subr.mxu0 0.0
  %465 = vmatpush1.msra.mxu0 0.0
  %466 = vmatprep.subr.mxu0 0.0
  %467 = vmatpush1.msra.mxu0 0.0
  %468 = vmatprep.subr.mxu0 0.0
  %469 = vmatpush1.msra.mxu0 0.0
  %470 = vmatprep.subr.mxu0 0.0
  %471 = vmatpush1.msra.mxu0 0.0
  %472 = vmatprep.subr.mxu0 0.0
  %473 = vmatpush1.msra.mxu0 0.0
  %474 = vmatprep.subr.mxu0 0.0
  %475 = vmatpush1.msra.mxu0 0.0
  %476 = vmatprep.subr.mxu0 0.0
  %477 = vmatpush1.msra.mxu0 0.0
  %478 = vmatprep.subr.mxu0 0.0
  %479 = vmatpush1.msra.mxu0 0.0
  %480 = vmatprep.subr.mxu0 0.0
  %481 = vmatpush1.msra.mxu0 0.0
  %482 = vmatprep.subr.mxu0 0.0
  %483 = vmatpush1.msra.mxu0 0.0
  %484 = vmatprep.subr.mxu0 0.0
  %485 = vmatpush1.msra.mxu0 0.0
  %486 = vmatprep.mubr.f32.mxu0 0.0
  %487 = vmatmul.mubr.f32.gmra.mrb[0].mxu0 %v345
  %v488 = vpop.f32.mrb[0].mxu0
  %v489 = vadd.f32 0.0, %v488
  %v490 = vpop.f32.mrb[0].mxu0
  %491 = vmatprep.mubr.f32.mxu0 0.0
  %492 = vmatmul.mubr.f32.gmra.mrb[0].mxu0 %v348
  %v493 = vpop.f32.mrb[0].mxu0
  %v494 = vadd.f32 0.0, %v493
  %v495 = vpop.f32.mrb[0].mxu0
  %496 = vmatprep.mubr.f32.mxu0 0.0
  %497 = vmatmul.mubr.f32.gmra.mrb[0].mxu0 %v351
  %v498 = vpop.f32.mrb[0].mxu0
  %v499 = vadd.f32 0.0, %v498
  %v500 = vpop.f32.mrb[0].mxu0
  %501 = vmatprep.mubr.f32.mxu0 0.0
  %502 = vmatmul.mubr.f32.gmra.mrb[0].mxu0 %v354
  %v503 = vpop.f32.mrb[0].mxu0
  %v504 = vadd.f32 0.0, %v503
  %v505 = vpop.f32.mrb[0].mxu0
  %506 = vmatprep.mubr.f32.mxu0 0.0
  %507 = vmatmul.mubr.f32.gmra.mrb[0].mxu0 %v357
  %v508 = vpop.f32.mrb[0].mxu0
  %v509 = vadd.f32 0.0, %v508
  %v510 = vpop.f32.mrb[0].mxu0
  %511 = vmatprep.mubr.f32.mxu0 0.0
  %512 = vmatmul.mubr.f32.gmra.mrb[0].mxu0 %v360
  %v513 = vpop.f32.mrb[0].mxu0
  %v514 = vadd.f32 0.0, %v513
  %v515 = vpop.f32.mrb[0].mxu0
  %516 = vmatprep.mubr.f32.mxu0 0.0
  %517 = vmatmul.mubr.f32.gmra.mrb[0].mxu0 %v363
  %v518 = vpop.f32.mrb[0].mxu0
  %v519 = vadd.f32 0.0, %v518
  %v520 = vpop.f32.mrb[0].mxu0
  %521 = vmatprep.mubr.f32.mxu0 0.0
  %522 = vmatmul.mubr.f32.gmra.mrb[0].mxu0 %v366
  %v523 = vpop.f32.mrb[0].mxu0
  %v524 = vadd.f32 0.0, %v523
  %v525 = vpop.f32.mrb[0].mxu0
  %526 = vmatprep.mubr.f32.mxu0 0.0
  %527 = vmatmul.mubr.f32.gmra.mrb[0].mxu0 %v369
  %v528 = vpop.f32.mrb[0].mxu0
  %v529 = vadd.f32 0.0, %v528
  %v530 = vpop.f32.mrb[0].mxu0
  %531 = vmatprep.mubr.f32.mxu0 0.0
  %532 = vmatmul.mubr.f32.gmra.mrb[0].mxu0 %v372
  %v533 = vpop.f32.mrb[0].mxu0
  %v534 = vadd.f32 0.0, %v533
  %v535 = vpop.f32.mrb[0].mxu0
  %536 = vmatprep.mubr.f32.mxu0 0.0
  %537 = vmatmul.mubr.f32.gmra.mrb[0].mxu0 %v375
  %v538 = vpop.f32.mrb[0].mxu0
  %v539 = vadd.f32 0.0, %v538
  %v540 = vpop.f32.mrb[0].mxu0
  %541 = vmatprep.mubr.f32.mxu0 0.0
  %542 = vmatmul.mubr.f32.gmra.mrb[0].mxu0 %v378
  %v543 = vpop.f32.mrb[0].mxu0
  %v544 = vadd.f32 0.0, %v543
  %v545 = vpop.f32.mrb[0].mxu0
  %546 = vmatprep.mubr.f32.mxu0 0.0
  %547 = vmatmul.mubr.f32.gmra.mrb[0].mxu0 %v381
  %v548 = vpop.f32.mrb[0].mxu0
  %v549 = vadd.f32 0.0, %v548
  %v550 = vpop.f32.mrb[0].mxu0
  %551 = vmatprep.mubr.f32.mxu0 0.0
  %552 = vmatmul.mubr.f32.gmra.mrb[0].mxu0 %v384
  %v553 = vpop.f32.mrb[0].mxu0
  %v554 = vadd.f32 0.0, %v553
  %v555 = vpop.f32.mrb[0].mxu0
  %556 = vmatprep.mubr.f32.mxu0 0.0
  %557 = vmatmul.mubr.f32.gmra.mrb[0].mxu0 %v387
  %v558 = vpop.f32.mrb[0].mxu0
  %v559 = vadd.f32 0.0, %v558
  %v560 = vpop.f32.mrb[0].mxu0
  %561 = vmatprep.mubr.f32.mxu0 0.0
  %562 = vmatmul.mubr.f32.gmra.mrb[0].mxu0 %v390
  %v563 = vpop.f32.mrb[0].mxu0
  %v564 = vadd.f32 0.0, %v563
  %v565 = vpop.f32.mrb[0].mxu0
  %566 = vmatprep.mubr.f32.mxu0 0.0
  %567 = vmatmul.mubr.f32.gmra.mrb[0].mxu0 %v393
  %v568 = vpop.f32.mrb[0].mxu0
  %v569 = vadd.f32 0.0, %v568
  %v570 = vpop.f32.mrb[0].mxu0
  %571 = vmatprep.mubr.f32.mxu0 0.0
  %572 = vmatmul.mubr.f32.gmra.mrb[0].mxu0 %v396
  %v573 = vpop.f32.mrb[0].mxu0
  %v574 = vadd.f32 0.0, %v573
  %v575 = vpop.f32.mrb[0].mxu0
  %576 = vmatprep.mubr.f32.mxu0 0.0
  %577 = vmatmul.mubr.f32.gmra.mrb[0].mxu0 %v399
  %v578 = vpop.f32.mrb[0].mxu0
  %v579 = vadd.f32 0.0, %v578
  %v580 = vpop.f32.mrb[0].mxu0
  %581 = vmatprep.mubr.f32.mxu0 0.0
  %582 = vmatmul.mubr.f32.gmra.mrb[0].mxu0 %v402
  %v583 = vpop.f32.mrb[0].mxu0
  %v584 = vadd.f32 0.0, %v583
  %v585 = vpop.f32.mrb[0].mxu0
  %586 = vmatprep.mubr.f32.mxu0 0.0
  %587 = vmatmul.mubr.f32.gmra.mrb[0].mxu0 %v405
  %v588 = vpop.f32.mrb[0].mxu0
  %v589 = vadd.f32 0.0, %v588
  %v590 = vpop.f32.mrb[0].mxu0
  %591 = vmatprep.mubr.f32.mxu0 0.0
  %592 = vmatmul.mubr.f32.gmra.mrb[0].mxu0 %v408
  %v593 = vpop.f32.mrb[0].mxu0
  %v594 = vadd.f32 0.0, %v593
  %v595 = vpop.f32.mrb[0].mxu0
  %596 = vmatprep.mubr.f32.mxu0 0.0
  %597 = vmatmul.mubr.f32.gmra.mrb[0].mxu0 %v411
  %v598 = vpop.f32.mrb[0].mxu0
  %v599 = vadd.f32 0.0, %v598
  %v600 = vpop.f32.mrb[0].mxu0
  %601 = vmatprep.mubr.f32.mxu0 0.0
  %602 = vmatmul.mubr.f32.gmra.mrb[0].mxu0 %v414
  %v603 = vpop.f32.mrb[0].mxu0
  %v604 = vadd.f32 0.0, %v603
  %v605 = vpop.f32.mrb[0].mxu0
  %606 = vmatprep.mubr.f32.mxu0 0.0
  %607 = vmatmul.mubr.f32.gmra.mrb[0].mxu0 %v417
  %v608 = vpop.f32.mrb[0].mxu0
  %v609 = vadd.f32 0.0, %v608
  %v610 = vpop.f32.mrb[0].mxu0
  %611 = vmatprep.mubr.f32.mxu0 0.0
  %612 = vmatmul.mubr.f32.gmra.mrb[0].mxu0 %v420
  %v613 = vpop.f32.mrb[0].mxu0
  %v614 = vadd.f32 0.0, %v613
  %v615 = vpop.f32.mrb[0].mxu0
  %616 = vdwg.mxu0
  %v617 = vmul.f32 %v190, 0.020408163
  %v618 = vmul.f32 %v195, 0.020408163
  %v619 = vmul.f32 %v200, 0.020408163
  %v620 = vmul.f32 %v205, 0.020408163
  %v621 = vmul.f32 %v210, 0.020408163
  %v622 = vmul.f32 %v215, 0.020408163
  %v623 = vmul.f32 %v220, 0.020408163
  %v624 = vmul.f32 %v225, 0.020408163
  %v625 = vmul.f32 %v230, 0.020408163
  %v626 = vmul.f32 %v235, 0.020408163
  %v627 = vmul.f32 %v240, 0.020408163
  %v628 = vmul.f32 %v245, 0.020408163
  %v629 = vmul.f32 %v250, 0.020408163
  %v630 = vmul.f32 %v255, 0.020408163
  %v631 = vmul.f32 %v260, 0.020408163
  %v632 = vmul.f32 %v265, 0.020408163
  %v633 = vmul.f32 %v270, 0.020408163
  %v634 = vmul.f32 %v275, 0.020408163
  %v635 = vmul.f32 %v280, 0.020408163
  %v636 = vmul.f32 %v285, 0.020408163
  %v637 = vmul.f32 %v290, 0.020408163
  %v638 = vmul.f32 %v295, 0.020408163
  %v639 = vmul.f32 %v300, 0.020408163
  %v640 = vmul.f32 %v305, 0.020408163
  %v641 = vmul.f32 %v310, 0.020408163
  %v642 = vmul.f32 %v315, 0.020408163
  %v643 = vmul.f32 %v489, 0.020408163
  %v644 = vmul.f32 %v494, 0.020408163
  %v645 = vmul.f32 %v499, 0.020408163
  %v646 = vmul.f32 %v504, 0.020408163
  %v647 = vmul.f32 %v509, 0.020408163
  %v648 = vmul.f32 %v514, 0.020408163
  %v649 = vmul.f32 %v519, 0.020408163
  %v650 = vmul.f32 %v524, 0.020408163
  %v651 = vmul.f32 %v529, 0.020408163
  %v652 = vmul.f32 %v534, 0.020408163
  %v653 = vmul.f32 %v539, 0.020408163
  %v654 = vmul.f32 %v544, 0.020408163
  %v655 = vmul.f32 %v549, 0.020408163
  %v656 = vmul.f32 %v554, 0.020408163
  %v657 = vmul.f32 %v559, 0.020408163
  %v658 = vmul.f32 %v564, 0.020408163
  %v659 = vmul.f32 %v569, 0.020408163
  %v660 = vmul.f32 %v574, 0.020408163
  %v661 = vmul.f32 %v579, 0.020408163
  %v662 = vmul.f32 %v584, 0.020408163
  %v663 = vmul.f32 %v589, 0.020408163
  %v664 = vmul.f32 %v594, 0.020408163
  %v665 = vmul.f32 %v599, 0.020408163
  %v666 = vmul.f32 %v604, 0.020408163
  %v667 = vmul.f32 %v609, 0.020408163
  %v668 = vmul.f32 %v614, 0.020408163
  %v669 = vmul.f32 %v617, %v617
  %v670 = vmul.f32 %v618, %v618
  %v671 = vmul.f32 %v619, %v619
  %v672 = vmul.f32 %v620, %v620
  %v673 = vmul.f32 %v621, %v621
  %v674 = vmul.f32 %v622, %v622
  %v675 = vmul.f32 %v623, %v623
  %v676 = vmul.f32 %v624, %v624
  %v677 = vmul.f32 %v625, %v625
  %v678 = vmul.f32 %v626, %v626
  %v679 = vmul.f32 %v627, %v627
  %v680 = vmul.f32 %v628, %v628
  %v681 = vmul.f32 %v629, %v629
  %v682 = vmul.f32 %v630, %v630
  %v683 = vmul.f32 %v631, %v631
  %v684 = vmul.f32 %v632, %v632
  %v685 = vmul.f32 %v633, %v633
  %v686 = vmul.f32 %v634, %v634
  %v687 = vmul.f32 %v635, %v635
  %v688 = vmul.f32 %v636, %v636
  %v689 = vmul.f32 %v637, %v637
  %v690 = vmul.f32 %v638, %v638
  %v691 = vmul.f32 %v639, %v639
  %v692 = vmul.f32 %v640, %v640
  %v693 = vmul.f32 %v641, %v641
  %v694 = vmul.f32 %v642, %v642
  %v695 = vsub.f32 %v643, %v669
  %v696 = vsub.f32 %v644, %v670
  %v697 = vsub.f32 %v645, %v671
  %v698 = vsub.f32 %v646, %v672
  %v699 = vsub.f32 %v647, %v673
  %v700 = vsub.f32 %v648, %v674
  %v701 = vsub.f32 %v649, %v675
  %v702 = vsub.f32 %v650, %v676
  %v703 = vsub.f32 %v651, %v677
  %v704 = vsub.f32 %v652, %v678
  %v705 = vsub.f32 %v653, %v679
  %v706 = vsub.f32 %v654, %v680
  %v707 = vsub.f32 %v655, %v681
  %v708 = vsub.f32 %v656, %v682
  %v709 = vsub.f32 %v657, %v683
  %v710 = vsub.f32 %v658, %v684
  %v711 = vsub.f32 %v659, %v685
  %v712 = vsub.f32 %v660, %v686
  %v713 = vsub.f32 %v661, %v687
  %v714 = vsub.f32 %v662, %v688
  %v715 = vsub.f32 %v663, %v689
  %v716 = vsub.f32 %v664, %v690
  %v717 = vsub.f32 %v665, %v691
  %v718 = vsub.f32 %v666, %v692
  %v719 = vsub.f32 %v667, %v693
  %v720 = vsub.f32 %v668, %v694
  %v721 = vmax.f32 %v695, 0.0
  %v722 = vmax.f32 %v696, 0.0
  %v723 = vmax.f32 %v697, 0.0
  %v724 = vmax.f32 %v698, 0.0
  %v725 = vmax.f32 %v699, 0.0
  %v726 = vmax.f32 %v700, 0.0
  %v727 = vmax.f32 %v701, 0.0
  %v728 = vmax.f32 %v702, 0.0
  %v729 = vmax.f32 %v703, 0.0
  %v730 = vmax.f32 %v704, 0.0
  %v731 = vmax.f32 %v705, 0.0
  %v732 = vmax.f32 %v706, 0.0
  %v733 = vmax.f32 %v707, 0.0
  %v734 = vmax.f32 %v708, 0.0
  %v735 = vmax.f32 %v709, 0.0
  %v736 = vmax.f32 %v710, 0.0
  %v737 = vmax.f32 %v711, 0.0
  %v738 = vmax.f32 %v712, 0.0
  %v739 = vmax.f32 %v713, 0.0
  %v740 = vmax.f32 %v714, 0.0
  %v741 = vmax.f32 %v715, 0.0
  %v742 = vmax.f32 %v716, 0.0
  %v743 = vmax.f32 %v717, 0.0
  %v744 = vmax.f32 %v718, 0.0
  %v745 = vmax.f32 %v719, 0.0
  %v746 = vmax.f32 %v720, 0.0
  %v747 = vadd.f32 %v721, 1e-05
  %v748 = vadd.f32 %v722, 1e-05
  %v749 = vadd.f32 %v723, 1e-05
  %v750 = vadd.f32 %v724, 1e-05
  %v751 = vadd.f32 %v725, 1e-05
  %v752 = vadd.f32 %v726, 1e-05
  %v753 = vadd.f32 %v727, 1e-05
  %v754 = vadd.f32 %v728, 1e-05
  %v755 = vadd.f32 %v729, 1e-05
  %v756 = vadd.f32 %v730, 1e-05
  %v757 = vadd.f32 %v731, 1e-05
  %v758 = vadd.f32 %v732, 1e-05
  %v759 = vadd.f32 %v733, 1e-05
  %v760 = vadd.f32 %v734, 1e-05
  %v761 = vadd.f32 %v735, 1e-05
  %v762 = vadd.f32 %v736, 1e-05
  %v763 = vadd.f32 %v737, 1e-05
  %v764 = vadd.f32 %v738, 1e-05
  %v765 = vadd.f32 %v739, 1e-05
  %v766 = vadd.f32 %v740, 1e-05
  %v767 = vadd.f32 %v741, 1e-05
  %v768 = vadd.f32 %v742, 1e-05
  %v769 = vadd.f32 %v743, 1e-05
  %v770 = vadd.f32 %v744, 1e-05
  %v771 = vadd.f32 %v745, 1e-05
  %v772 = vadd.f32 %v746, 1e-05
  %v773 = vrsqrt.pop %v747
  %v774 = vrsqrt.pop %v748
  %v775 = vrsqrt.pop %v749
  %v776 = vrsqrt.pop %v750
  %v777 = vrsqrt.pop %v751
  %v778 = vrsqrt.pop %v752
  %v779 = vrsqrt.pop %v753
  %v780 = vrsqrt.pop %v754
  %v781 = vrsqrt.pop %v755
  %v782 = vrsqrt.pop %v756
  %v783 = vrsqrt.pop %v757
  %v784 = vrsqrt.pop %v758
  %v785 = vrsqrt.pop %v759
  %v786 = vrsqrt.pop %v760
  %v787 = vrsqrt.pop %v761
  %v788 = vrsqrt.pop %v762
  %v789 = vrsqrt.pop %v763
  %v790 = vrsqrt.pop %v764
  %v791 = vrsqrt.pop %v765
  %v792 = vrsqrt.pop %v766
  %v793 = vrsqrt.pop %v767
  %v794 = vrsqrt.pop %v768
  %v795 = vrsqrt.pop %v769
  %v796 = vrsqrt.pop %v770
  %v797 = vrsqrt.pop %v771
  %v798 = vrsqrt.pop %v772
  %v799 = vsub.f32 %v14, %v617
  %v800 = vsub.f32 %v15, %v618
  %v801 = vsub.f32 %v16, %v619
  %v802 = vsub.f32 %v17, %v620
  %v803 = vsub.f32 %v18, %v621
  %v804 = vsub.f32 %v19, %v622
  %v805 = vsub.f32 %v20, %v623
  %v806 = vsub.f32 %v21, %v624
  %v807 = vsub.f32 %v22, %v625
  %v808 = vsub.f32 %v23, %v626
  %v809 = vsub.f32 %v24, %v627
  %v810 = vsub.f32 %v25, %v628
  %v811 = vsub.f32 %v26, %v629
  %v812 = vsub.f32 %v27, %v630
  %v813 = vsub.f32 %v28, %v631
  %v814 = vsub.f32 %v29, %v632
  %v815 = vsub.f32 %v30, %v633
  %v816 = vsub.f32 %v31, %v634
  %v817 = vsub.f32 %v32, %v635
  %v818 = vsub.f32 %v33, %v636
  %v819 = vsub.f32 %v34, %v637
  %v820 = vsub.f32 %v35, %v638
  %v821 = vsub.f32 %v36, %v639
  %v822 = vsub.f32 %v37, %v640
  %v823 = vsub.f32 %v38, %v641
  %v824 = vsub.f32 %v39, %v642
  %v825 = vld [vmem:[%s1] sm:$0xff]
  %v826 = vld [vmem:[%s1 + $0x8] sm:$0xff]
  %v827 = vld [vmem:[%s1 + $0x10] sm:$0xff]
  %v828 = vld [vmem:[%s1 + $0x18] sm:$0xff]
  %v829 = vld [vmem:[%s1 + $0x20] sm:$0xff]
  %v830 = vld [vmem:[%s1 + $0x28] sm:$0xff]
  %v831 = vld [vmem:[%s1 + $0x30] sm:$0xff]
  %v832 = vld [vmem:[%s1 + $0x38] sm:$0xff]
  %v833 = vld [vmem:[%s1 + $0x40] sm:$0xff]
  %v834 = vld [vmem:[%s1 + $0x48] sm:$0xff]
  %v835 = vld [vmem:[%s1 + $0x50] sm:$0xff]
  %v836 = vld [vmem:[%s1 + $0x58] sm:$0xff]
  %v837 = vld [vmem:[%s1 + $0x60] sm:$0xff]
  %v838 = vld [vmem:[%s1 + $0x68] sm:$0xff]
  %v839 = vld [vmem:[%s1 + $0x70] sm:$0xff]
  %v840 = vld [vmem:[%s1 + $0x78] sm:$0xff]
  %v841 = vld [vmem:[%s1 + $0x80] sm:$0xff]
  %v842 = vld [vmem:[%s1 + $0x88] sm:$0xff]
  %v843 = vld [vmem:[%s1 + $0x90] sm:$0xff]
  %v844 = vld [vmem:[%s1 + $0x98] sm:$0xff]
  %v845 = vld [vmem:[%s1 + $0xa0] sm:$0xff]
  %v846 = vld [vmem:[%s1 + $0xa8] sm:$0xff]
  %v847 = vld [vmem:[%s1 + $0xb0] sm:$0xff]
  %v848 = vld [vmem:[%s1 + $0xb8] sm:$0xff]
  %v849 = vld [vmem:[%s1 + $0xc0] sm:$0xff]
  %v850 = vld [vmem:[%s1 + $0xc8] sm:$0xff]
  %852 = vset.pattern.permute.xlu0 0
  %853 = vperm.xlu0 %852, %v825
  %v854 = vpop.permute.xlu0 %853
  %857 = vset.pattern.permute.xlu0 0
  %858 = vperm.xlu0 %857, %v826
  %v859 = vpop.permute.xlu0 %858
  %862 = vset.pattern.permute.xlu0 0
  %863 = vperm.xlu0 %862, %v827
  %v864 = vpop.permute.xlu0 %863
  %867 = vset.pattern.permute.xlu0 0
  %868 = vperm.xlu0 %867, %v828
  %v869 = vpop.permute.xlu0 %868
  %872 = vset.pattern.permute.xlu0 0
  %873 = vperm.xlu0 %872, %v829
  %v874 = vpop.permute.xlu0 %873
  %877 = vset.pattern.permute.xlu0 0
  %878 = vperm.xlu0 %877, %v830
  %v879 = vpop.permute.xlu0 %878
  %882 = vset.pattern.permute.xlu0 0
  %883 = vperm.xlu0 %882, %v831
  %v884 = vpop.permute.xlu0 %883
  %887 = vset.pattern.permute.xlu0 0
  %888 = vperm.xlu0 %887, %v832
  %v889 = vpop.permute.xlu0 %888
  %892 = vset.pattern.permute.xlu0 0
  %893 = vperm.xlu0 %892, %v833
  %v894 = vpop.permute.xlu0 %893
  %897 = vset.pattern.permute.xlu0 0
  %898 = vperm.xlu0 %897, %v834
  %v899 = vpop.permute.xlu0 %898
  %902 = vset.pattern.permute.xlu0 0
  %903 = vperm.xlu0 %902, %v835
  %v904 = vpop.permute.xlu0 %903
  %907 = vset.pattern.permute.xlu0 0
  %908 = vperm.xlu0 %907, %v836
  %v909 = vpop.permute.xlu0 %908
  %912 = vset.pattern.permute.xlu0 0
  %913 = vperm.xlu0 %912, %v837
  %v914 = vpop.permute.xlu0 %913
  %917 = vset.pattern.permute.xlu0 0
  %918 = vperm.xlu0 %917, %v838
  %v919 = vpop.permute.xlu0 %918
  %922 = vset.pattern.permute.xlu0 0
  %923 = vperm.xlu0 %922, %v839
  %v924 = vpop.permute.xlu0 %923
  %927 = vset.pattern.permute.xlu0 0
  %928 = vperm.xlu0 %927, %v840
  %v929 = vpop.permute.xlu0 %928
  %932 = vset.pattern.permute.xlu0 0
  %933 = vperm.xlu0 %932, %v841
  %v934 = vpop.permute.xlu0 %933
  %937 = vset.pattern.permute.xlu0 0
  %938 = vperm.xlu0 %937, %v842
  %v939 = vpop.permute.xlu0 %938
  %942 = vset.pattern.permute.xlu0 0
  %943 = vperm.xlu0 %942, %v843
  %v944 = vpop.permute.xlu0 %943
  %947 = vset.pattern.permute.xlu0 0
  %948 = vperm.xlu0 %947, %v844
  %v949 = vpop.permute.xlu0 %948
  %952 = vset.pattern.permute.xlu0 0
  %953 = vperm.xlu0 %952, %v845
  %v954 = vpop.permute.xlu0 %953
  %957 = vset.pattern.permute.xlu0 0
  %958 = vperm.xlu0 %957, %v846
  %v959 = vpop.permute.xlu0 %958
  %962 = vset.pattern.permute.xlu0 0
  %963 = vperm.xlu0 %962, %v847
  %v964 = vpop.permute.xlu0 %963
  %967 = vset.pattern.permute.xlu0 0
  %968 = vperm.xlu0 %967, %v848
  %v969 = vpop.permute.xlu0 %968
  %972 = vset.pattern.permute.xlu0 0
  %973 = vperm.xlu0 %972, %v849
  %v974 = vpop.permute.xlu0 %973
  %977 = vset.pattern.permute.xlu0 0
  %978 = vperm.xlu0 %977, %v850
  %v979 = vpop.permute.xlu0 %978
  %v981 = vmul.f32 %v773, %v854
  %v982 = vmul.f32 %v774, %v859
  %v983 = vmul.f32 %v775, %v864
  %v984 = vmul.f32 %v776, %v869
  %v985 = vmul.f32 %v777, %v874
  %v986 = vmul.f32 %v778, %v879
  %v987 = vmul.f32 %v779, %v884
  %v988 = vmul.f32 %v780, %v889
  %v989 = vmul.f32 %v781, %v894
  %v990 = vmul.f32 %v782, %v899
  %v991 = vmul.f32 %v783, %v904
  %v992 = vmul.f32 %v784, %v909
  %v993 = vmul.f32 %v785, %v914
  %v994 = vmul.f32 %v786, %v919
  %v995 = vmul.f32 %v787, %v924
  %v996 = vmul.f32 %v788, %v929
  %v997 = vmul.f32 %v789, %v934
  %v998 = vmul.f32 %v790, %v939
  %v999 = vmul.f32 %v791, %v944
  %v1000 = vmul.f32 %v792, %v949
  %v1001 = vmul.f32 %v793, %v954
  %v1002 = vmul.f32 %v794, %v959
  %v1003 = vmul.f32 %v795, %v964
  %v1004 = vmul.f32 %v796, %v969
  %v1005 = vmul.f32 %v797, %v974
  %v1006 = vmul.f32 %v798, %v979
  %v1007 = vmul.f32 %v799, %v981
  %v1008 = vmul.f32 %v800, %v982
  %v1009 = vmul.f32 %v801, %v983
  %v1010 = vmul.f32 %v802, %v984
  %v1011 = vmul.f32 %v803, %v985
  %v1012 = vmul.f32 %v804, %v986
  %v1013 = vmul.f32 %v805, %v987
  %v1014 = vmul.f32 %v806, %v988
  %v1015 = vmul.f32 %v807, %v989
  %v1016 = vmul.f32 %v808, %v990
  %v1017 = vmul.f32 %v809, %v991
  %v1018 = vmul.f32 %v810, %v992
  %v1019 = vmul.f32 %v811, %v993
  %v1020 = vmul.f32 %v812, %v994
  %v1021 = vmul.f32 %v813, %v995
  %v1022 = vmul.f32 %v814, %v996
  %v1023 = vmul.f32 %v815, %v997
  %v1024 = vmul.f32 %v816, %v998
  %v1025 = vmul.f32 %v817, %v999
  %v1026 = vmul.f32 %v818, %v1000
  %v1027 = vmul.f32 %v819, %v1001
  %v1028 = vmul.f32 %v820, %v1002
  %v1029 = vmul.f32 %v821, %v1003
  %v1030 = vmul.f32 %v822, %v1004
  %v1031 = vmul.f32 %v823, %v1005
  %v1032 = vmul.f32 %v824, %v1006
  %v1033 = vld [vmem:[%s2] sm:$0xff]
  %v1034 = vld [vmem:[%s2 + $0x8] sm:$0xff]
  %v1035 = vld [vmem:[%s2 + $0x10] sm:$0xff]
  %v1036 = vld [vmem:[%s2 + $0x18] sm:$0xff]
  %v1037 = vld [vmem:[%s2 + $0x20] sm:$0xff]
  %v1038 = vld [vmem:[%s2 + $0x28] sm:$0xff]
  %v1039 = vld [vmem:[%s2 + $0x30] sm:$0xff]
  %v1040 = vld [vmem:[%s2 + $0x38] sm:$0xff]
  %v1041 = vld [vmem:[%s2 + $0x40] sm:$0xff]
  %v1042 = vld [vmem:[%s2 + $0x48] sm:$0xff]
  %v1043 = vld [vmem:[%s2 + $0x50] sm:$0xff]
  %v1044 = vld [vmem:[%s2 + $0x58] sm:$0xff]
  %v1045 = vld [vmem:[%s2 + $0x60] sm:$0xff]
  %v1046 = vld [vmem:[%s2 + $0x68] sm:$0xff]
  %v1047 = vld [vmem:[%s2 + $0x70] sm:$0xff]
  %v1048 = vld [vmem:[%s2 + $0x78] sm:$0xff]
  %v1049 = vld [vmem:[%s2 + $0x80] sm:$0xff]
  %v1050 = vld [vmem:[%s2 + $0x88] sm:$0xff]
  %v1051 = vld [vmem:[%s2 + $0x90] sm:$0xff]
  %v1052 = vld [vmem:[%s2 + $0x98] sm:$0xff]
  %v1053 = vld [vmem:[%s2 + $0xa0] sm:$0xff]
  %v1054 = vld [vmem:[%s2 + $0xa8] sm:$0xff]
  %v1055 = vld [vmem:[%s2 + $0xb0] sm:$0xff]
  %v1056 = vld [vmem:[%s2 + $0xb8] sm:$0xff]
  %v1057 = vld [vmem:[%s2 + $0xc0] sm:$0xff]
  %v1058 = vld [vmem:[%s2 + $0xc8] sm:$0xff]
  %1060 = vset.pattern.permute.xlu0 0
  %1061 = vperm.xlu0 %1060, %v1033
  %v1062 = vpop.permute.xlu0 %1061
  %1065 = vset.pattern.permute.xlu0 0
  %1066 = vperm.xlu0 %1065, %v1034
  %v1067 = vpop.permute.xlu0 %1066
  %1070 = vset.pattern.permute.xlu0 0
  %1071 = vperm.xlu0 %1070, %v1035
  %v1072 = vpop.permute.xlu0 %1071
  %1075 = vset.pattern.permute.xlu0 0
  %1076 = vperm.xlu0 %1075, %v1036
  %v1077 = vpop.permute.xlu0 %1076
  %1080 = vset.pattern.permute.xlu0 0
  %1081 = vperm.xlu0 %1080, %v1037
  %v1082 = vpop.permute.xlu0 %1081
  %1085 = vset.pattern.permute.xlu0 0
  %1086 = vperm.xlu0 %1085, %v1038
  %v1087 = vpop.permute.xlu0 %1086
  %1090 = vset.pattern.permute.xlu0 0
  %1091 = vperm.xlu0 %1090, %v1039
  %v1092 = vpop.permute.xlu0 %1091
  %1095 = vset.pattern.permute.xlu0 0
  %1096 = vperm.xlu0 %1095, %v1040
  %v1097 = vpop.permute.xlu0 %1096
  %1100 = vset.pattern.permute.xlu0 0
  %1101 = vperm.xlu0 %1100, %v1041
  %v1102 = vpop.permute.xlu0 %1101
  %1105 = vset.pattern.permute.xlu0 0
  %1106 = vperm.xlu0 %1105, %v1042
  %v1107 = vpop.permute.xlu0 %1106
  %1110 = vset.pattern.permute.xlu0 0
  %1111 = vperm.xlu0 %1110, %v1043
  %v1112 = vpop.permute.xlu0 %1111
  %1115 = vset.pattern.permute.xlu0 0
  %1116 = vperm.xlu0 %1115, %v1044
  %v1117 = vpop.permute.xlu0 %1116
  %1120 = vset.pattern.permute.xlu0 0
  %1121 = vperm.xlu0 %1120, %v1045
  %v1122 = vpop.permute.xlu0 %1121
  %1125 = vset.pattern.permute.xlu0 0
  %1126 = vperm.xlu0 %1125, %v1046
  %v1127 = vpop.permute.xlu0 %1126
  %1130 = vset.pattern.permute.xlu0 0
  %1131 = vperm.xlu0 %1130, %v1047
  %v1132 = vpop.permute.xlu0 %1131
  %1135 = vset.pattern.permute.xlu0 0
  %1136 = vperm.xlu0 %1135, %v1048
  %v1137 = vpop.permute.xlu0 %1136
  %1140 = vset.pattern.permute.xlu0 0
  %1141 = vperm.xlu0 %1140, %v1049
  %v1142 = vpop.permute.xlu0 %1141
  %1145 = vset.pattern.permute.xlu0 0
  %1146 = vperm.xlu0 %1145, %v1050
  %v1147 = vpop.permute.xlu0 %1146
  %1150 = vset.pattern.permute.xlu0 0
  %1151 = vperm.xlu0 %1150, %v1051
  %v1152 = vpop.permute.xlu0 %1151
  %1155 = vset.pattern.permute.xlu0 0
  %1156 = vperm.xlu0 %1155, %v1052
  %v1157 = vpop.permute.xlu0 %1156
  %1160 = vset.pattern.permute.xlu0 0
  %1161 = vperm.xlu0 %1160, %v1053
  %v1162 = vpop.permute.xlu0 %1161
  %1165 = vset.pattern.permute.xlu0 0
  %1166 = vperm.xlu0 %1165, %v1054
  %v1167 = vpop.permute.xlu0 %1166
  %1170 = vset.pattern.permute.xlu0 0
  %1171 = vperm.xlu0 %1170, %v1055
  %v1172 = vpop.permute.xlu0 %1171
  %1175 = vset.pattern.permute.xlu0 0
  %1176 = vperm.xlu0 %1175, %v1056
  %v1177 = vpop.permute.xlu0 %1176
  %1180 = vset.pattern.permute.xlu0 0
  %1181 = vperm.xlu0 %1180, %v1057
  %v1182 = vpop.permute.xlu0 %1181
  %1185 = vset.pattern.permute.xlu0 0
  %1186 = vperm.xlu0 %1185, %v1058
  %v1187 = vpop.permute.xlu0 %1186
  %v1189 = vadd.f32 %v1007, %v1062
  %v1190 = vadd.f32 %v1008, %v1067
  %v1191 = vadd.f32 %v1009, %v1072
  %v1192 = vadd.f32 %v1010, %v1077
  %v1193 = vadd.f32 %v1011, %v1082
  %v1194 = vadd.f32 %v1012, %v1087
  %v1195 = vadd.f32 %v1013, %v1092
  %v1196 = vadd.f32 %v1014, %v1097
  %v1197 = vadd.f32 %v1015, %v1102
  %v1198 = vadd.f32 %v1016, %v1107
  %v1199 = vadd.f32 %v1017, %v1112
  %v1200 = vadd.f32 %v1018, %v1117
  %v1201 = vadd.f32 %v1019, %v1122
  %v1202 = vadd.f32 %v1020, %v1127
  %v1203 = vadd.f32 %v1021, %v1132
  %v1204 = vadd.f32 %v1022, %v1137
  %v1205 = vadd.f32 %v1023, %v1142
  %v1206 = vadd.f32 %v1024, %v1147
  %v1207 = vadd.f32 %v1025, %v1152
  %v1208 = vadd.f32 %v1026, %v1157
  %v1209 = vadd.f32 %v1027, %v1162
  %v1210 = vadd.f32 %v1028, %v1167
  %v1211 = vadd.f32 %v1029, %v1172
  %v1212 = vadd.f32 %v1030, %v1177
  %v1213 = vadd.f32 %v1031, %v1182
  %v1214 = vadd.f32 %v1032, %v1187
  %1215 = vst.msk [vmem:[%s3] sm:$0xff] %vm40, %v1189
  %1216 = vst.msk [vmem:[%s3 + $0x8] sm:$0xff] %vm40, %v1190
  %1217 = vst.msk [vmem:[%s3 + $0x10] sm:$0xff] %vm40, %v1191
  %1218 = vst.msk [vmem:[%s3 + $0x18] sm:$0xff] %vm40, %v1192
  %1219 = vst.msk [vmem:[%s3 + $0x20] sm:$0xff] %vm40, %v1193
  %1220 = vst.msk [vmem:[%s3 + $0x28] sm:$0xff] %vm40, %v1194
  %1221 = vst.msk [vmem:[%s3 + $0x30] sm:$0xff] %vm40, %v1195
  %1222 = vst.msk [vmem:[%s3 + $0x38] sm:$0xff] %vm40, %v1196
  %1223 = vst.msk [vmem:[%s3 + $0x40] sm:$0xff] %vm40, %v1197
  %1224 = vst.msk [vmem:[%s3 + $0x48] sm:$0xff] %vm40, %v1198
  %1225 = vst.msk [vmem:[%s3 + $0x50] sm:$0xff] %vm40, %v1199
  %1226 = vst.msk [vmem:[%s3 + $0x58] sm:$0xff] %vm40, %v1200
  %1227 = vst.msk [vmem:[%s3 + $0x60] sm:$0xff] %vm40, %v1201
  %1228 = vst.msk [vmem:[%s3 + $0x68] sm:$0xff] %vm40, %v1202
  %1229 = vst.msk [vmem:[%s3 + $0x70] sm:$0xff] %vm40, %v1203
  %1230 = vst.msk [vmem:[%s3 + $0x78] sm:$0xff] %vm40, %v1204
  %1231 = vst.msk [vmem:[%s3 + $0x80] sm:$0xff] %vm40, %v1205
  %1232 = vst.msk [vmem:[%s3 + $0x88] sm:$0xff] %vm40, %v1206
  %1233 = vst.msk [vmem:[%s3 + $0x90] sm:$0xff] %vm40, %v1207
  %1234 = vst.msk [vmem:[%s3 + $0x98] sm:$0xff] %vm40, %v1208
  %1235 = vst.msk [vmem:[%s3 + $0xa0] sm:$0xff] %vm40, %v1209
  %1236 = vst.msk [vmem:[%s3 + $0xa8] sm:$0xff] %vm40, %v1210
  %1237 = vst.msk [vmem:[%s3 + $0xb0] sm:$0xff] %vm40, %v1211
  %1238 = vst.msk [vmem:[%s3 + $0xb8] sm:$0xff] %vm40, %v1212
  %1239 = vst.msk [vmem:[%s3 + $0xc0] sm:$0xff] %vm40, %v1213
  %1240 = vst.msk [vmem:[%s3 + $0xc8] sm:$0xff] %vm40, %v1214
  // Predicated region
  $region14: #{tpu_custom_call.1} parent=0 // pred_check
    _
  $region15: #{tpu_custom_call.1} parent=0 // pred_check_branch
    %1242 = sbr.rel (0) target = $region17
  $region16: #{tpu_custom_call.1} parent=0 // pred_region
    _
  $region17: #{tpu_custom_call.1} parent=0 // pred_fallthru
    _
  // Predicated region
  $region18: #{tpu_custom_call.1} parent=0 // pred_check
    _
  $region19: #{tpu_custom_call.1} parent=0 // pred_check_branch
    %1244 = sbr.rel (0) target = $region21
  $region20: #{tpu_custom_call.1} parent=0 // pred_region
    _
  $region21: #{tpu_custom_call.1} parent=0 // pred_fallthru
    _

</llo_original>
